<compile_context>
chip_gen: v6e
topology: v6e:2x2x1
jax: 0.10.0
libtpu: 0.0.40
codegen_flags: <defaults>
</compile_context>

<pallas_src>
import functools

import jax
import jax.numpy as jnp
import numpy as np
from jax.experimental import pallas as pl
from jax.experimental.pallas import tpu as pltpu


# ----------------------------------------------------------------------------
# Pallas kernel: whole MLP fused, one invocation per batch tile.
# Activations are feature-major: (features, batch_tile), batch on lanes.
# ----------------------------------------------------------------------------
def _resdnn_kernel(n_hidden, x_ref, *refs):
    """refs = (wT_0, b_0, ..., wT_{H-1}, b_{H-1}, w_last, b_last, out_ref)."""
    out_ref = refs[-1]
    wb = refs[:-1]

    # One XLU transpose at ingest: (batch_tile, D_in) -> (D_in, batch_tile).
    h = x_ref[...].T

    # Hidden layers: Linear -> ReLU.  MXU M = out (<=64), K = in, N = batch
    # tile (lane-dense, fills the MXU columns).  f32 accumulation; bias add +
    # ReLU in f32 (v5e-safe VPU path); re-cast to the compute dtype feeds the
    # next matmul.
    for li in range(n_hidden):
        wT = wb[2 * li][...]                       # (out, in)  compute dtype
        b = wb[2 * li + 1][...]                    # (out, 1)   f32
        h = jnp.dot(wT, h.astype(wT.dtype),
                    preferred_element_type=jnp.float32)      # (out, bt) f32
        h = jnp.maximum(h + b, 0.0)                           # ReLU

    # Final Linear(out_size, 1): VPU multiply + XLU sublane reduce instead of
    # a wasteful 1-wide MXU pass; result is already the lane-dense row.
    w_last = wb[-2][...]                           # (out_size, 1) f32
    b_last = wb[-1][...]                           # (1, 1)        f32
    row = jnp.sum(h * w_last, axis=0, keepdims=True) + b_last    # (1, bt)
    out_ref[...] = row[None].astype(out_ref.dtype)               # (1, 1, bt)


def _pick_batch_tile(batch):
    # Batch rides the lane axis of every intermediate, so tiles are multiples
    # of 128 lanes.  Small batches: a single tile (splitting only adds the
    # ~0.35 us/grid-step overhead on single-TC v5e/v6e and gives v7x nothing
    # useful).  Large batches: big tiles to amortize grid overhead, but >=2
    # tiles so both v7x TensorCores get >=256 rows each.
    if batch <= 512:
        return max(128, pl.cdiv(batch, 128) * 128)
    for bt in (2048, 1024, 512, 256):
        if pl.cdiv(batch, bt) >= 2:
            return bt
    return 256


def resdnn_forward(x, layers, *, batch_tile=None, compute_dtype=jnp.bfloat16):
    """layers: list of (W[in,out], b[1,out]) for every Linear incl. the head.

    compute_dtype controls the ingest dtype of x and the hidden weights
    (bf16 default: MXU-native everywhere, halves HBM bytes for x).  Matmul
    accumulation, biases, ReLU and the final 1-wide layer are always f32.
    """
    B, D_in = x.shape
    n_layers = len(layers)
    n_hidden = n_layers - 1

    if batch_tile is None:
        batch_tile = _pick_batch_tile(B)
    n_tiles = pl.cdiv(B, batch_tile)
    pad_B = n_tiles * batch_tile
    if pad_B != B:                       # ragged batch: pad, slice afterwards
        x = jnp.pad(x, ((0, pad_B - B), (0, 0)))

    x = x.astype(compute_dtype)

    _const2 = lambda i: (0, 0)
    args = [x]
    in_specs = [pl.BlockSpec((batch_tile, D_in), lambda i: (i, 0))]

    # Hidden layers: weights pre-transposed to (out, in) feature-major and
    # cast to the compute dtype; biases reshaped to (out, 1), kept f32.
    for (w, b) in layers[:-1]:
        wT = jnp.asarray(w).T.astype(compute_dtype)              # (out, in)
        bT = jnp.asarray(b).reshape(-1, 1).astype(jnp.float32)   # (out, 1)
        args += [wT, bT]
        # Full-array blocks with constant index -> VMEM-resident, no re-DMA.
        in_specs += [pl.BlockSpec(wT.shape, _const2),
                     pl.BlockSpec(bT.shape, _const2)]

    # Final Linear(out_size, 1): stays f32 (computed on VPU/XLU, not MXU).
    w_last, b_last = layers[-1]
    w_last = jnp.asarray(w_last).astype(jnp.float32)             # (out_size, 1)
    b_last = jnp.asarray(b_last).reshape(1, 1).astype(jnp.float32)
    args += [w_last, b_last]
    in_specs += [pl.BlockSpec(w_last.shape, _const2),
                 pl.BlockSpec(b_last.shape, _const2)]

    flops = 2 * pad_B * sum(int(w.shape[0]) * int(w.shape[1]) for w, _ in layers)
    bytes_accessed = (int(x.size) * x.dtype.itemsize
                      + sum(int(a.size) * a.dtype.itemsize for a in args[1:])
                      + pad_B * 4)

    kernel = functools.partial(_resdnn_kernel, n_hidden)

    out = pl.pallas_call(
        kernel,
        # Lane-dense output: (n_tiles, 1, batch_tile); batch lives on lanes.
        out_shape=jax.ShapeDtypeStruct((n_tiles, 1, batch_tile), jnp.float32),
        grid=(n_tiles,),
        in_specs=in_specs,
        out_specs=pl.BlockSpec((1, 1, batch_tile), lambda i: (i, 0, 0)),
        compiler_params=pltpu.CompilerParams(
            dimension_semantics=("parallel",),
            vmem_limit_bytes=32 * 1024 * 1024),     # v7x-safe (64 MiB VMEM/TC)
        cost_estimate=pl.CostEstimate(flops=flops, transcendentals=0,
                                      bytes_accessed=bytes_accessed),
    )(*args)

    return out.reshape(pad_B, 1)[:B]


# ----------------------------------------------------------------------------
# Parameter construction (mirrors TorchResDNN.__init__ / build_block).
# ----------------------------------------------------------------------------
def build_block_sizes(size, num_layers, rate, min_size, input_size):
    """Replicates build_block's size schedule; returns [(in, out), ...]."""
    dims = [(input_size, size)]
    previous_size = int(size)
    for _ in np.arange(num_layers - 1):
        size = int(size * rate)
        if size < min_size:
            size = min_size
        dims.append((previous_size, size))
        previous_size = size
    return dims, size


def init_params(model_params, key):
    """Xavier-normal weights (like nn.init.xavier_normal_), zero biases."""
    dims, out_size = build_block_sizes(
        model_params['fb_initial_size'], model_params['fb_layers'],
        model_params['fb_rate'], model_params['fb_min_size'],
        model_params['initial_size'])
    if model_params['sb_layers'] > 0:
        dims2, out_size = build_block_sizes(
            model_params['sb_initial_size'], model_params['sb_layers'],
            model_params['sb_rate'], model_params['sb_min_size'], out_size)
        dims = dims + dims2
    dims.append((out_size, 1))  # final_layer = nn.Linear(output_size, 1)

    layers = []
    for (fan_in, fan_out) in dims:
        key, sub = jax.random.split(key)
        std = float(np.sqrt(2.0 / (fan_in + fan_out)))  # xavier_normal_
        w = std * jax.random.normal(sub, (fan_in, fan_out), dtype=jnp.float32)
        b = jnp.zeros((1, fan_out), dtype=jnp.float32)
        layers.append((w, b))
    return layers


def reference_forward(x, layers):
    h = x
    n = len(layers)
    for li, (w, b) in enumerate(layers):
        h = h @ w + b
        if li < n - 1:
            h = jnp.maximum(h, 0.0)
    return h


# ----------------------------------------------------------------------------
if __name__ == "__main__":
    model_params = {
        'initial_size': 32,       # input feature dim
        'fb_initial_size': 64, 'fb_layers': 2, 'fb_rate': 0.5, 'fb_min_size': 16,
        'sb_initial_size': 32, 'sb_layers': 2, 'sb_rate': 0.5, 'sb_min_size': 8,
        'activation': 'relu',
        'dropout': 0.0,           # dropout disabled -> no dropout layers in stack
    }

    key = jax.random.PRNGKey(0)
    key, xkey = jax.random.split(key)
    layers = init_params(model_params, key)

    batch = 16
    x = jax.random.normal(xkey, (batch, model_params['initial_size']),
                          dtype=jnp.float32)

    ref = reference_forward(x, layers)

    # f32 ingest path (portable) — tight tolerance.
    logit_f32 = jax.block_until_ready(
        resdnn_forward(x, layers, compute_dtype=jnp.float32))
    assert logit_f32.shape == (batch, 1)
    np.testing.assert_allclose(np.asarray(logit_f32), np.asarray(ref),
                               rtol=1e-5, atol=1e-5)

    # Default bf16-ingest path (f32 accumulation / elementwise) — loose check.
    # Note: activations round-trip f32->bf16 between layers, so error grows
    # slightly layer by layer (fine for inference).
    logit_bf16 = jax.block_until_ready(resdnn_forward(x, layers))
    assert logit_bf16.shape == (batch, 1)
    np.testing.assert_allclose(np.asarray(logit_bf16), np.asarray(ref),
                               rtol=1e-1, atol=1e-1)

    print("KERNEL_OK")
</pallas_src>

<mosaic_0001>
module attributes {stable_mosaic.version = 11 : i64} {
  func.func @_resdnn_kernel(%arg0: i32, %arg1: memref<128x32xf32, #tpu.memory_space<vmem>>, %arg2: memref<64x32xf32, #tpu.memory_space<vmem>>, %arg3: memref<64x1xf32, #tpu.memory_space<vmem>>, %arg4: memref<32x64xf32, #tpu.memory_space<vmem>>, %arg5: memref<32x1xf32, #tpu.memory_space<vmem>>, %arg6: memref<32x32xf32, #tpu.memory_space<vmem>>, %arg7: memref<32x1xf32, #tpu.memory_space<vmem>>, %arg8: memref<16x32xf32, #tpu.memory_space<vmem>>, %arg9: memref<16x1xf32, #tpu.memory_space<vmem>>, %arg10: memref<16x1xf32, #tpu.memory_space<vmem>>, %arg11: memref<1x1xf32, #tpu.memory_space<vmem>>, %arg12: memref<1x1x128xf32, #tpu.memory_space<vmem>>) attributes {dimension_semantics = [#tpu.dimension_semantics<parallel>], iteration_bounds = array<i64: 1>, scalar_prefetch = 0 : i64, scratch_operands = 0 : i64, tpu.core_type = #tpu.core_type<tc>, window_params = [{transform_indices = @transform_0, window_bounds = array<i64: 128, 32>}, {pipeline_mode = #tpu.pipeline_mode<synchronous>, transform_indices = @transform_1, window_bounds = array<i64: 64, 32>}, {pipeline_mode = #tpu.pipeline_mode<synchronous>, transform_indices = @transform_2, window_bounds = array<i64: 64, 1>}, {pipeline_mode = #tpu.pipeline_mode<synchronous>, transform_indices = @transform_3, window_bounds = array<i64: 32, 64>}, {pipeline_mode = #tpu.pipeline_mode<synchronous>, transform_indices = @transform_4, window_bounds = array<i64: 32, 1>}, {pipeline_mode = #tpu.pipeline_mode<synchronous>, transform_indices = @transform_5, window_bounds = array<i64: 32, 32>}, {pipeline_mode = #tpu.pipeline_mode<synchronous>, transform_indices = @transform_6, window_bounds = array<i64: 32, 1>}, {pipeline_mode = #tpu.pipeline_mode<synchronous>, transform_indices = @transform_7, window_bounds = array<i64: 16, 32>}, {pipeline_mode = #tpu.pipeline_mode<synchronous>, transform_indices = @transform_8, window_bounds = array<i64: 16, 1>}, {pipeline_mode = #tpu.pipeline_mode<synchronous>, transform_indices = @transform_9, window_bounds = array<i64: 16, 1>}, {pipeline_mode = #tpu.pipeline_mode<synchronous>, transform_indices = @transform_10, window_bounds = array<i64: 1, 1>}, {transform_indices = @transform_11, window_bounds = array<i64: 1, 1, 128>}]} {
    %c0 = arith.constant 0 : index
    %c0_0 = arith.constant 0 : index
    %0 = vector.load %arg1[%c0, %c0_0] : memref<128x32xf32, #tpu.memory_space<vmem>>, vector<128x32xf32>
    %1 = tpu.transpose %0, [1, 0] : vector<128x32xf32> -> vector<32x128xf32>
    %c0_1 = arith.constant 0 : index
    %c0_2 = arith.constant 0 : index
    %2 = vector.load %arg2[%c0_1, %c0_2] : memref<64x32xf32, #tpu.memory_space<vmem>>, vector<64x32xf32>
    %c0_3 = arith.constant 0 : index
    %c0_4 = arith.constant 0 : index
    %3 = vector.load %arg3[%c0_3, %c0_4] : memref<64x1xf32, #tpu.memory_space<vmem>>, vector<64x1xf32>
    %cst = arith.constant dense<0.000000e+00> : vector<64x128xf32>
    %4 = tpu.matmul %2, %1, %cst {dimension_numbers = #tpu.dot_dimension_numbers<[1], [0], [0], [1], [0, 0, 1, 1], [], []>} : vector<64x32xf32>, vector<32x128xf32>, vector<64x128xf32> -> vector<64x128xf32>
    %5 = vector.broadcast %3 : vector<64x1xf32> to vector<64x128xf32>
    %6 = arith.addf %4, %5 : vector<64x128xf32>
    %cst_5 = arith.constant 0.000000e+00 : f32
    %7 = vector.broadcast %cst_5 : f32 to vector<64x128xf32>
    %8 = arith.maximumf %6, %7 : vector<64x128xf32>
    %c0_6 = arith.constant 0 : index
    %c0_7 = arith.constant 0 : index
    %9 = vector.load %arg4[%c0_6, %c0_7] : memref<32x64xf32, #tpu.memory_space<vmem>>, vector<32x64xf32>
    %c0_8 = arith.constant 0 : index
    %c0_9 = arith.constant 0 : index
    %10 = vector.load %arg5[%c0_8, %c0_9] : memref<32x1xf32, #tpu.memory_space<vmem>>, vector<32x1xf32>
    %cst_10 = arith.constant dense<0.000000e+00> : vector<32x128xf32>
    %11 = tpu.matmul %9, %8, %cst_10 {dimension_numbers = #tpu.dot_dimension_numbers<[1], [0], [0], [1], [0, 0, 1, 1], [], []>} : vector<32x64xf32>, vector<64x128xf32>, vector<32x128xf32> -> vector<32x128xf32>
    %12 = vector.broadcast %10 : vector<32x1xf32> to vector<32x128xf32>
    %13 = arith.addf %11, %12 : vector<32x128xf32>
    %cst_11 = arith.constant 0.000000e+00 : f32
    %14 = vector.broadcast %cst_11 : f32 to vector<32x128xf32>
    %15 = arith.maximumf %13, %14 : vector<32x128xf32>
    %c0_12 = arith.constant 0 : index
    %c0_13 = arith.constant 0 : index
    %16 = vector.load %arg6[%c0_12, %c0_13] : memref<32x32xf32, #tpu.memory_space<vmem>>, vector<32x32xf32>
    %c0_14 = arith.constant 0 : index
    %c0_15 = arith.constant 0 : index
    %17 = vector.load %arg7[%c0_14, %c0_15] : memref<32x1xf32, #tpu.memory_space<vmem>>, vector<32x1xf32>
    %cst_16 = arith.constant dense<0.000000e+00> : vector<32x128xf32>
    %18 = tpu.matmul %16, %15, %cst_16 {dimension_numbers = #tpu.dot_dimension_numbers<[1], [0], [0], [1], [0, 0, 1, 1], [], []>} : vector<32x32xf32>, vector<32x128xf32>, vector<32x128xf32> -> vector<32x128xf32>
    %19 = vector.broadcast %17 : vector<32x1xf32> to vector<32x128xf32>
    %20 = arith.addf %18, %19 : vector<32x128xf32>
    %cst_17 = arith.constant 0.000000e+00 : f32
    %21 = vector.broadcast %cst_17 : f32 to vector<32x128xf32>
    %22 = arith.maximumf %20, %21 : vector<32x128xf32>
    %c0_18 = arith.constant 0 : index
    %c0_19 = arith.constant 0 : index
    %23 = vector.load %arg8[%c0_18, %c0_19] : memref<16x32xf32, #tpu.memory_space<vmem>>, vector<16x32xf32>
    %c0_20 = arith.constant 0 : index
    %c0_21 = arith.constant 0 : index
    %24 = vector.load %arg9[%c0_20, %c0_21] : memref<16x1xf32, #tpu.memory_space<vmem>>, vector<16x1xf32>
    %cst_22 = arith.constant dense<0.000000e+00> : vector<16x128xf32>
    %25 = tpu.matmul %23, %22, %cst_22 {dimension_numbers = #tpu.dot_dimension_numbers<[1], [0], [0], [1], [0, 0, 1, 1], [], []>} : vector<16x32xf32>, vector<32x128xf32>, vector<16x128xf32> -> vector<16x128xf32>
    %26 = vector.broadcast %24 : vector<16x1xf32> to vector<16x128xf32>
    %27 = arith.addf %25, %26 : vector<16x128xf32>
    %cst_23 = arith.constant 0.000000e+00 : f32
    %28 = vector.broadcast %cst_23 : f32 to vector<16x128xf32>
    %29 = arith.maximumf %27, %28 : vector<16x128xf32>
    %c0_24 = arith.constant 0 : index
    %c0_25 = arith.constant 0 : index
    %30 = vector.load %arg10[%c0_24, %c0_25] : memref<16x1xf32, #tpu.memory_space<vmem>>, vector<16x1xf32>
    %c0_26 = arith.constant 0 : index
    %c0_27 = arith.constant 0 : index
    %31 = vector.load %arg11[%c0_26, %c0_27] : memref<1x1xf32, #tpu.memory_space<vmem>>, vector<1x1xf32>
    %32 = vector.broadcast %30 : vector<16x1xf32> to vector<16x128xf32>
    %33 = arith.mulf %29, %32 : vector<16x128xf32>
    %cst_28 = arith.constant dense<0.000000e+00> : vector<128xf32>
    %34 = vector.multi_reduction <add>, %33, %cst_28 [0] : vector<16x128xf32> to vector<128xf32>
    %35 = vector.shape_cast %34 : vector<128xf32> to vector<1x128xf32>
    %36 = vector.broadcast %31 : vector<1x1xf32> to vector<1x128xf32>
    %37 = arith.addf %35, %36 : vector<1x128xf32>
    %38 = vector.shape_cast %37 : vector<1x128xf32> to vector<1x1x128xf32>
    %c0_29 = arith.constant 0 : index
    %c0_30 = arith.constant 0 : index
    %c0_31 = arith.constant 0 : index
    %39 = vector.load %arg12[%c0_29, %c0_30, %c0_31] : memref<1x1x128xf32, #tpu.memory_space<vmem>>, vector<1x1x128xf32>
    tpu.vector_store %arg12[%c0_29, %c0_30, %c0_31], %38 {strides = array<i32>} : memref<1x1x128xf32, #tpu.memory_space<vmem>>, vector<1x1x128xf32>,
    return
  }
  func.func @transform_0(%arg0: i32) -> (i32, i32) {
    %c0_i32 = arith.constant 0 : i32
    %c0_i32_0 = arith.constant 0 : i32
    return %arg0, %c0_i32 : i32, i32
  }
  func.func @transform_1(%arg0: i32) -> (i32, i32) {
    %c0_i32 = arith.constant 0 : i32
    %c0_i32_0 = arith.constant 0 : i32
    %c0_i32_1 = arith.constant 0 : i32
    return %c0_i32, %c0_i32_0 : i32, i32
  }
  func.func @transform_2(%arg0: i32) -> (i32, i32) {
    %c0_i32 = arith.constant 0 : i32
    %c0_i32_0 = arith.constant 0 : i32
    %c0_i32_1 = arith.constant 0 : i32
    return %c0_i32, %c0_i32_0 : i32, i32
  }
  func.func @transform_3(%arg0: i32) -> (i32, i32) {
    %c0_i32 = arith.constant 0 : i32
    %c0_i32_0 = arith.constant 0 : i32
    %c0_i32_1 = arith.constant 0 : i32
    return %c0_i32, %c0_i32_0 : i32, i32
  }
  func.func @transform_4(%arg0: i32) -> (i32, i32) {
    %c0_i32 = arith.constant 0 : i32
    %c0_i32_0 = arith.constant 0 : i32
    %c0_i32_1 = arith.constant 0 : i32
    return %c0_i32, %c0_i32_0 : i32, i32
  }
  func.func @transform_5(%arg0: i32) -> (i32, i32) {
    %c0_i32 = arith.constant 0 : i32
    %c0_i32_0 = arith.constant 0 : i32
    %c0_i32_1 = arith.constant 0 : i32
    return %c0_i32, %c0_i32_0 : i32, i32
  }
  func.func @transform_6(%arg0: i32) -> (i32, i32) {
    %c0_i32 = arith.constant 0 : i32
    %c0_i32_0 = arith.constant 0 : i32
    %c0_i32_1 = arith.constant 0 : i32
    return %c0_i32, %c0_i32_0 : i32, i32
  }
  func.func @transform_7(%arg0: i32) -> (i32, i32) {
    %c0_i32 = arith.constant 0 : i32
    %c0_i32_0 = arith.constant 0 : i32
    %c0_i32_1 = arith.constant 0 : i32
    return %c0_i32, %c0_i32_0 : i32, i32
  }
  func.func @transform_8(%arg0: i32) -> (i32, i32) {
    %c0_i32 = arith.constant 0 : i32
    %c0_i32_0 = arith.constant 0 : i32
    %c0_i32_1 = arith.constant 0 : i32
    return %c0_i32, %c0_i32_0 : i32, i32
  }
  func.func @transform_9(%arg0: i32) -> (i32, i32) {
    %c0_i32 = arith.constant 0 : i32
    %c0_i32_0 = arith.constant 0 : i32
    %c0_i32_1 = arith.constant 0 : i32
    return %c0_i32, %c0_i32_0 : i32, i32
  }
  func.func @transform_10(%arg0: i32) -> (i32, i32) {
    %c0_i32 = arith.constant 0 : i32
    %c0_i32_0 = arith.constant 0 : i32
    %c0_i32_1 = arith.constant 0 : i32
    return %c0_i32, %c0_i32_0 : i32, i32
  }
  func.func @transform_11(%arg0: i32) -> (i32, i32, i32) {
    %c0_i32 = arith.constant 0 : i32
    %c0_i32_0 = arith.constant 0 : i32
    %c0_i32_1 = arith.constant 0 : i32
    return %arg0, %c0_i32, %c0_i32_0 : i32, i32, i32
  }
}

</mosaic_0001>

<llo_original>
// kernel: tpu_custom_call.1
$region0: #{tpu_custom_call.1}
  #allocation0 [shape = 'u32[]', space=smem, size = 0x4, offset = 0x4, fixed_abs, tag = 'smem constant byte address 0x4 - core index']
  #allocation1 [shape = 'u32[144,128]{1,0:T(1,128)}', space=vmem, size = 0x12000, scoped, tag = 'internal scratch']
  #allocation2 [shape = 'f32[1,1]{1,0:T(1,128)S(1)}', space=vmem, size = 0x200, scoped, tag = 'scoped memory for tpu_custom_call.1']
  %s0 = inlined_call_operand.vmem [shape: f32[128,32], index: 0, kind: input, shape index: {}]
  %s1 = inlined_call_operand.vmem [shape: f32[64,32], index: 1, kind: input, shape index: {}]
  %s2 = inlined_call_operand.vmem [shape: f32[64,1], index: 2, kind: input, shape index: {}]
  %s3 = inlined_call_operand.vmem [shape: f32[32,64], index: 3, kind: input, shape index: {}]
  %s4 = inlined_call_operand.vmem [shape: f32[32,1], index: 4, kind: input, shape index: {}]
  %s5 = inlined_call_operand.vmem [shape: f32[32,32], index: 5, kind: input, shape index: {}]
  %s6 = inlined_call_operand.vmem [shape: f32[32,1], index: 6, kind: input, shape index: {}]
  %s7 = inlined_call_operand.vmem [shape: f32[16,32], index: 7, kind: input, shape index: {}]
  %s8 = inlined_call_operand.vmem [shape: f32[16,1], index: 8, kind: input, shape index: {}]
  %s9 = inlined_call_operand.vmem [shape: f32[16,1], index: 9, kind: input, shape index: {}]
  %s10 = inlined_call_operand.<no memory space> [shape: f32[1,1], index: 10, kind: input, shape index: {}]
  %s11 = inlined_call_operand.hbm [shape: f32[1,1,128], index: 11, kind: output, shape index: {}]
  %s12 = sld [smem:[#allocation0]]
  $region54: #{tpu_custom_call.1} parent=0
    _
  %s14 = ssub.s32 1, %s12
  %s15 = scalar_select 0, %s14, %s12
  %v16 = vstv %s10
  %17 = vst [vmem:[#allocation2] sm:$0x1] %v16
  $region1: #{tpu_custom_call.1} parent=0
    #allocation3 [shape = 'u8[512]{0}', space=vmem, size = 0x400, scoped, tag = 'output window, operand 0, single buffered']
    #allocation4 [shape = 's32[1]{0}', space=sflag, size = 0x4, scoped, tag = 'scoped memory for tpu_custom_call.1']
    %18 = vsyncpa [#allocation4], 0
    // Predicated region
    $region2: #{tpu_custom_call.1} parent=1 // pred_check
      _
    $region3: #{tpu_custom_call.1} parent=1 // pred_check_branch
      %20 = sbr.rel (0) target = $region5
    $region4: #{tpu_custom_call.1} parent=1 // pred_region
      _
    $region5: #{tpu_custom_call.1} parent=1 // pred_fallthru
      _
    // Predicated region
    $region6: #{tpu_custom_call.1} parent=1 // pred_check
      _
    $region7: #{tpu_custom_call.1} parent=1 // pred_check_branch
      %22 = sbr.rel (0) target = $region9
    $region8: #{tpu_custom_call.1} parent=1 // pred_region
      _
    $region9: #{tpu_custom_call.1} parent=1 // pred_fallthru
      _
    // Predicated region
    $region10: #{tpu_custom_call.1} parent=1 // pred_check
      _
    $region11: #{tpu_custom_call.1} parent=1 // pred_check_branch
      %24 = sbr.rel (0) target = $region13
    $region12: #{tpu_custom_call.1} parent=1 // pred_region
      _
    $region13: #{tpu_custom_call.1} parent=1 // pred_fallthru
      _
    // Predicated region
    $region14: #{tpu_custom_call.1} parent=1 // pred_check
      _
    $region15: #{tpu_custom_call.1} parent=1 // pred_check_branch
      %26 = sbr.rel (0) target = $region17
    $region16: #{tpu_custom_call.1} parent=1 // pred_region
      _
    $region17: #{tpu_custom_call.1} parent=1 // pred_fallthru
      _
    // Predicated region
    $region18: #{tpu_custom_call.1} parent=1 // pred_check
      _
    $region19: #{tpu_custom_call.1} parent=1 // pred_check_branch
      %28 = sbr.rel (0) target = $region21
    $region20: #{tpu_custom_call.1} parent=1 // pred_region
      _
    $region21: #{tpu_custom_call.1} parent=1 // pred_fallthru
      _
    // Predicated region
    $region22: #{tpu_custom_call.1} parent=1 // pred_check
      _
    $region23: #{tpu_custom_call.1} parent=1 // pred_check_branch
      %30 = sbr.rel (0) target = $region25
    $region24: #{tpu_custom_call.1} parent=1 // pred_region
      _
    $region25: #{tpu_custom_call.1} parent=1 // pred_fallthru
      _
    // Predicated region
    $region26: #{tpu_custom_call.1} parent=1 // pred_check
      _
    $region27: #{tpu_custom_call.1} parent=1 // pred_check_branch
      %32 = sbr.rel (0) target = $region29
    $region28: #{tpu_custom_call.1} parent=1 // pred_region
      _
    $region29: #{tpu_custom_call.1} parent=1 // pred_fallthru
      _
    // Predicated region
    $region30: #{tpu_custom_call.1} parent=1 // pred_check
      _
    $region31: #{tpu_custom_call.1} parent=1 // pred_check_branch
      %34 = sbr.rel (0) target = $region33
    $region32: #{tpu_custom_call.1} parent=1 // pred_region
      _
    $region33: #{tpu_custom_call.1} parent=1 // pred_fallthru
      _
    // Predicated region
    $region34: #{tpu_custom_call.1} parent=1 // pred_check
      _
    $region35: #{tpu_custom_call.1} parent=1 // pred_check_branch
      %36 = sbr.rel (0) target = $region37
    $region36: #{tpu_custom_call.1} parent=1 // pred_region
      _
    $region37: #{tpu_custom_call.1} parent=1 // pred_fallthru
      _
    // Predicated region
    $region38: #{tpu_custom_call.1} parent=1 // pred_check
      _
    $region39: #{tpu_custom_call.1} parent=1 // pred_check_branch
      %38 = sbr.rel (0) target = $region41
    $region40: #{tpu_custom_call.1} parent=1 // pred_region
      _
    $region41: #{tpu_custom_call.1} parent=1 // pred_fallthru
      _
    // Predicated region
    $region42: #{tpu_custom_call.1} parent=1 // pred_check
      _
    $region43: #{tpu_custom_call.1} parent=1 // pred_check_branch
      %40 = sbr.rel (0) target = $region45
    $region44: #{tpu_custom_call.1} parent=1 // pred_region
      _
    $region45: #{tpu_custom_call.1} parent=1 // pred_fallthru
      _
    %v41 = vld [vmem:[%s0] sm:$0xff]
    %v42 = vld [vmem:[%s0 + $0x8] sm:$0xff]
    %v43 = vld [vmem:[%s0 + $0x10] sm:$0xff]
    %v44 = vld [vmem:[%s0 + $0x18] sm:$0xff]
    %v45 = vld [vmem:[%s0 + $0x20] sm:$0xff]
    %v46 = vld [vmem:[%s0 + $0x28] sm:$0xff]
    %v47 = vld [vmem:[%s0 + $0x30] sm:$0xff]
    %v48 = vld [vmem:[%s0 + $0x38] sm:$0xff]
    %v49 = vld [vmem:[%s0 + $0x40] sm:$0xff]
    %v50 = vld [vmem:[%s0 + $0x48] sm:$0xff]
    %v51 = vld [vmem:[%s0 + $0x50] sm:$0xff]
    %v52 = vld [vmem:[%s0 + $0x58] sm:$0xff]
    %v53 = vld [vmem:[%s0 + $0x60] sm:$0xff]
    %v54 = vld [vmem:[%s0 + $0x68] sm:$0xff]
    %v55 = vld [vmem:[%s0 + $0x70] sm:$0xff]
    %v56 = vld [vmem:[%s0 + $0x78] sm:$0xff]
    %v57 = vld [vmem:[%s1] sm:$0xff]
    %v58 = vld [vmem:[%s1 + $0x8] sm:$0xff]
    %v59 = vld [vmem:[%s1 + $0x10] sm:$0xff]
    %v60 = vld [vmem:[%s1 + $0x18] sm:$0xff]
    %v61 = vld [vmem:[%s1 + $0x20] sm:$0xff]
    %v62 = vld [vmem:[%s1 + $0x28] sm:$0xff]
    %v63 = vld [vmem:[%s1 + $0x30] sm:$0xff]
    %v64 = vld [vmem:[%s1 + $0x38] sm:$0xff]
    %v65 = vld [vmem:[%s2] sm:$0xff]
    %v66 = vld [vmem:[%s2 + $0x8] sm:$0xff]
    %v67 = vld [vmem:[%s2 + $0x10] sm:$0xff]
    %v68 = vld [vmem:[%s2 + $0x18] sm:$0xff]
    %v69 = vld [vmem:[%s2 + $0x20] sm:$0xff]
    %v70 = vld [vmem:[%s2 + $0x28] sm:$0xff]
    %v71 = vld [vmem:[%s2 + $0x30] sm:$0xff]
    %v72 = vld [vmem:[%s2 + $0x38] sm:$0xff]
    %74 = vset.pattern.permute.xlu0 0
    %75 = vperm.xlu0 %74, %v65
    %v76 = vpop.permute.xlu0 %75
    %79 = vset.pattern.permute.xlu0 0
    %80 = vperm.xlu0 %79, %v66
    %v81 = vpop.permute.xlu0 %80
    %84 = vset.pattern.permute.xlu0 0
    %85 = vperm.xlu0 %84, %v67
    %v86 = vpop.permute.xlu0 %85
    %89 = vset.pattern.permute.xlu0 0
    %90 = vperm.xlu0 %89, %v68
    %v91 = vpop.permute.xlu0 %90
    %94 = vset.pattern.permute.xlu0 0
    %95 = vperm.xlu0 %94, %v69
    %v96 = vpop.permute.xlu0 %95
    %99 = vset.pattern.permute.xlu0 0
    %100 = vperm.xlu0 %99, %v70
    %v101 = vpop.permute.xlu0 %100
    %104 = vset.pattern.permute.xlu0 0
    %105 = vperm.xlu0 %104, %v71
    %v106 = vpop.permute.xlu0 %105
    %109 = vset.pattern.permute.xlu0 0
    %110 = vperm.xlu0 %109, %v72
    %v111 = vpop.permute.xlu0 %110
    %vm113 = vcmask 261120
    %v115 = vsel %vm113, %v57, 0
    %v118 = vsel %vm113, %v58, 0
    %v121 = vsel %vm113, %v59, 0
    %v124 = vsel %vm113, %v60, 0
    %v127 = vsel %vm113, %v61, 0
    %v130 = vsel %vm113, %v62, 0
    %v133 = vsel %vm113, %v63, 0
    %v136 = vsel %vm113, %v64, 0
    %v139 = vsel %vm113, %v41, 0
    %v142 = vsel %vm113, %v42, 0
    %v145 = vsel %vm113, %v43, 0
    %v148 = vsel %vm113, %v44, 0
    %v151 = vsel %vm113, %v45, 0
    %v154 = vsel %vm113, %v46, 0
    %v157 = vsel %vm113, %v47, 0
    %v160 = vsel %vm113, %v48, 0
    %v163 = vsel %vm113, %v49, 0
    %v166 = vsel %vm113, %v50, 0
    %v169 = vsel %vm113, %v51, 0
    %v172 = vsel %vm113, %v52, 0
    %v175 = vsel %vm113, %v53, 0
    %v178 = vsel %vm113, %v54, 0
    %v181 = vsel %vm113, %v55, 0
    %v184 = vsel %vm113, %v56, 0
    %186 = vmatprep.subr.mxu0 0.0
    %187 = vmatpush1.xpose.msra.mxu0 %v184
    %188 = vmatprep.subr.mxu0 0.0
    %189 = vmatpush1.xpose.msra.mxu0 %v181
    %190 = vmatprep.subr.mxu0 0.0
    %191 = vmatpush1.xpose.msra.mxu0 %v178
    %192 = vmatprep.subr.mxu0 0.0
    %193 = vmatpush1.xpose.msra.mxu0 %v175
    %194 = vmatprep.subr.mxu0 0.0
    %195 = vmatpush1.xpose.msra.mxu0 %v172
    %196 = vmatprep.subr.mxu0 0.0
    %197 = vmatpush1.xpose.msra.mxu0 %v169
    %198 = vmatprep.subr.mxu0 0.0
    %199 = vmatpush1.xpose.msra.mxu0 %v166
    %200 = vmatprep.subr.mxu0 0.0
    %201 = vmatpush1.xpose.msra.mxu0 %v163
    %202 = vmatprep.subr.mxu0 0.0
    %203 = vmatpush1.xpose.msra.mxu0 %v160
    %204 = vmatprep.subr.mxu0 0.0
    %205 = vmatpush1.xpose.msra.mxu0 %v157
    %206 = vmatprep.subr.mxu0 0.0
    %207 = vmatpush1.xpose.msra.mxu0 %v154
    %208 = vmatprep.subr.mxu0 0.0
    %209 = vmatpush1.xpose.msra.mxu0 %v151
    %210 = vmatprep.subr.mxu0 0.0
    %211 = vmatpush1.xpose.msra.mxu0 %v148
    %212 = vmatprep.subr.mxu0 0.0
    %213 = vmatpush1.xpose.msra.mxu0 %v145
    %214 = vmatprep.subr.mxu0 0.0
    %215 = vmatpush1.xpose.msra.mxu0 %v142
    %216 = vmatprep.subr.mxu0 0.0
    %217 = vmatpush1.xpose.msra.mxu0 %v139
    %218 = vmatprep.subr.mxu0 0.0
    %219 = vmatpush2.xpose.msra.mxu0 0.0
    %220 = vmatprep.subr.mxu0 0.0
    %221 = vmatpush2.xpose.msra.mxu0 0.0
    %222 = vmatprep.subr.mxu0 0.0
    %223 = vmatpush2.xpose.msra.mxu0 0.0
    %224 = vmatprep.subr.mxu0 0.0
    %225 = vmatpush2.xpose.msra.mxu0 0.0
    %226 = vmatprep.subr.mxu0 0.0
    %227 = vmatpush2.xpose.msra.mxu0 0.0
    %228 = vmatprep.subr.mxu0 0.0
    %229 = vmatpush2.xpose.msra.mxu0 0.0
    %230 = vmatprep.subr.mxu0 0.0
    %231 = vmatpush2.xpose.msra.mxu0 0.0
    %232 = vmatprep.subr.mxu0 0.0
    %233 = vmatpush2.xpose.msra.mxu0 0.0
    %234 = vmatprep.subr.mxu0 0.0
    %235 = vmatpush2.xpose.msra.mxu0 0.0
    %236 = vmatprep.subr.mxu0 0.0
    %237 = vmatpush2.xpose.msra.mxu0 0.0
    %238 = vmatprep.subr.mxu0 0.0
    %239 = vmatpush2.xpose.msra.mxu0 0.0
    %240 = vmatprep.subr.mxu0 0.0
    %241 = vmatpush2.xpose.msra.mxu0 0.0
    %242 = vmatprep.subr.mxu0 0.0
    %243 = vmatpush2.xpose.msra.mxu0 0.0
    %244 = vmatprep.subr.mxu0 0.0
    %245 = vmatpush2.xpose.msra.mxu0 0.0
    %246 = vmatprep.subr.mxu0 0.0
    %247 = vmatpush2.xpose.msra.mxu0 0.0
    %248 = vmatprep.subr.mxu0 0.0
    %249 = vmatpush2.xpose.msra.mxu0 0.0
    %250 = vmatprep.mubr.f32.mxu0 0.0
    %251 = vmatmul.mubr.f32.gmra.mxu0 %v115
    %v252 = vpop.f32.mrf.mxu0
    %v253 = vadd.f32 %v76, %v252
    %v254 = vpop.f32.mrf.mxu0
    %255 = vmatprep.mubr.f32.mxu0 0.0
    %256 = vmatmul.mubr.f32.gmra.mxu0 %v118
    %v257 = vpop.f32.mrf.mxu0
    %v258 = vadd.f32 %v81, %v257
    %v259 = vpop.f32.mrf.mxu0
    %260 = vmatprep.mubr.f32.mxu0 0.0
    %261 = vmatmul.mubr.f32.gmra.mxu0 %v121
    %v262 = vpop.f32.mrf.mxu0
    %v263 = vadd.f32 %v86, %v262
    %v264 = vpop.f32.mrf.mxu0
    %265 = vmatprep.mubr.f32.mxu0 0.0
    %266 = vmatmul.mubr.f32.gmra.mxu0 %v124
    %v267 = vpop.f32.mrf.mxu0
    %v268 = vadd.f32 %v91, %v267
    %v269 = vpop.f32.mrf.mxu0
    %270 = vmatprep.mubr.f32.mxu0 0.0
    %271 = vmatmul.mubr.f32.gmra.mxu0 %v127
    %v272 = vpop.f32.mrf.mxu0
    %v273 = vadd.f32 %v96, %v272
    %v274 = vpop.f32.mrf.mxu0
    %275 = vmatprep.mubr.f32.mxu0 0.0
    %276 = vmatmul.mubr.f32.gmra.mxu0 %v130
    %v277 = vpop.f32.mrf.mxu0
    %v278 = vadd.f32 %v101, %v277
    %v279 = vpop.f32.mrf.mxu0
    %280 = vmatprep.mubr.f32.mxu0 0.0
    %281 = vmatmul.mubr.f32.gmra.mxu0 %v133
    %v282 = vpop.f32.mrf.mxu0
    %v283 = vadd.f32 %v106, %v282
    %v284 = vpop.f32.mrf.mxu0
    %285 = vmatprep.mubr.f32.mxu0 0.0
    %286 = vmatmul.mubr.f32.gmra.mxu0 %v136
    %v287 = vpop.f32.mrf.mxu0
    %v288 = vadd.f32 %v111, %v287
    %v289 = vpop.f32.mrf.mxu0
    %290 = vdwg.mxu0
    %v291 = vmax.f32 %v253, 0.0
    %v292 = vmax.f32 %v258, 0.0
    %v293 = vmax.f32 %v263, 0.0
    %v294 = vmax.f32 %v268, 0.0
    %v295 = vmax.f32 %v273, 0.0
    %v296 = vmax.f32 %v278, 0.0
    %v297 = vmax.f32 %v283, 0.0
    %v298 = vmax.f32 %v288, 0.0
    %v299 = vld [vmem:[%s3] sm:$0xff]
    %v300 = vld [vmem:[%s3 + $0x8] sm:$0xff]
    %v301 = vld [vmem:[%s3 + $0x10] sm:$0xff]
    %v302 = vld [vmem:[%s3 + $0x18] sm:$0xff]
    %v303 = vld [vmem:[%s4] sm:$0xff]
    %v304 = vld [vmem:[%s4 + $0x8] sm:$0xff]
    %v305 = vld [vmem:[%s4 + $0x10] sm:$0xff]
    %v306 = vld [vmem:[%s4 + $0x18] sm:$0xff]
    %308 = vset.pattern.permute.xlu0 0
    %309 = vperm.xlu0 %308, %v303
    %v310 = vpop.permute.xlu0 %309
    %313 = vset.pattern.permute.xlu0 0
    %314 = vperm.xlu0 %313, %v304
    %v315 = vpop.permute.xlu0 %314
    %318 = vset.pattern.permute.xlu0 0
    %319 = vperm.xlu0 %318, %v305
    %v320 = vpop.permute.xlu0 %319
    %323 = vset.pattern.permute.xlu0 0
    %324 = vperm.xlu0 %323, %v306
    %v325 = vpop.permute.xlu0 %324
    %vm327 = vcmask 523264
    %v329 = vsel %vm327, %v299, 0
    %v332 = vsel %vm327, %v300, 0
    %v335 = vsel %vm327, %v301, 0
    %v338 = vsel %vm327, %v302, 0
    %340 = vmatprep.subr.mxu0 0.0
    %341 = vmatpush1.msra.mxu0 0.0
    %342 = vmatprep.subr.mxu0 0.0
    %343 = vmatpush1.msra.mxu0 0.0
    %344 = vmatprep.subr.mxu0 0.0
    %345 = vmatpush1.msra.mxu0 0.0
    %346 = vmatprep.subr.mxu0 0.0
    %347 = vmatpush1.msra.mxu0 0.0
    %348 = vmatprep.subr.mxu0 0.0
    %349 = vmatpush1.msra.mxu0 0.0
    %350 = vmatprep.subr.mxu0 0.0
    %351 = vmatpush1.msra.mxu0 0.0
    %352 = vmatprep.subr.mxu0 0.0
    %353 = vmatpush1.msra.mxu0 0.0
    %354 = vmatprep.subr.mxu0 0.0
    %355 = vmatpush1.msra.mxu0 0.0
    %356 = vmatprep.subr.mxu0 0.0
    %357 = vmatpush1.msra.mxu0 %v298
    %358 = vmatprep.subr.mxu0 0.0
    %359 = vmatpush1.msra.mxu0 %v297
    %360 = vmatprep.subr.mxu0 0.0
    %361 = vmatpush1.msra.mxu0 %v296
    %362 = vmatprep.subr.mxu0 0.0
    %363 = vmatpush1.msra.mxu0 %v295
    %364 = vmatprep.subr.mxu0 0.0
    %365 = vmatpush1.msra.mxu0 %v294
    %366 = vmatprep.subr.mxu0 0.0
    %367 = vmatpush1.msra.mxu0 %v293
    %368 = vmatprep.subr.mxu0 0.0
    %369 = vmatpush1.msra.mxu0 %v292
    %370 = vmatprep.subr.mxu0 0.0
    %371 = vmatpush1.msra.mxu0 %v291
    %372 = vmatprep.subr.mxu0 0.0
    %373 = vmatpush2.msra.mxu0 0.0
    %374 = vmatprep.subr.mxu0 0.0
    %375 = vmatpush2.msra.mxu0 0.0
    %376 = vmatprep.subr.mxu0 0.0
    %377 = vmatpush2.msra.mxu0 0.0
    %378 = vmatprep.subr.mxu0 0.0
    %379 = vmatpush2.msra.mxu0 0.0
    %380 = vmatprep.subr.mxu0 0.0
    %381 = vmatpush2.msra.mxu0 0.0
    %382 = vmatprep.subr.mxu0 0.0
    %383 = vmatpush2.msra.mxu0 0.0
    %384 = vmatprep.subr.mxu0 0.0
    %385 = vmatpush2.msra.mxu0 0.0
    %386 = vmatprep.subr.mxu0 0.0
    %387 = vmatpush2.msra.mxu0 0.0
    %388 = vmatprep.subr.mxu0 0.0
    %389 = vmatpush2.msra.mxu0 0.0
    %390 = vmatprep.subr.mxu0 0.0
    %391 = vmatpush2.msra.mxu0 0.0
    %392 = vmatprep.subr.mxu0 0.0
    %393 = vmatpush2.msra.mxu0 0.0
    %394 = vmatprep.subr.mxu0 0.0
    %395 = vmatpush2.msra.mxu0 0.0
    %396 = vmatprep.subr.mxu0 0.0
    %397 = vmatpush2.msra.mxu0 0.0
    %398 = vmatprep.subr.mxu0 0.0
    %399 = vmatpush2.msra.mxu0 0.0
    %400 = vmatprep.subr.mxu0 0.0
    %401 = vmatpush2.msra.mxu0 0.0
    %402 = vmatprep.subr.mxu0 0.0
    %403 = vmatpush2.msra.mxu0 0.0
    %404 = vmatprep.mubr.f32.mxu0 0.0
    %405 = vmatmul.mubr.f32.gmra.mxu0 %v329
    %v406 = vpop.f32.mrf.mxu0
    %v407 = vadd.f32 %v310, %v406
    %v408 = vpop.f32.mrf.mxu0
    %409 = vmatprep.mubr.f32.mxu0 0.0
    %410 = vmatmul.mubr.f32.gmra.mxu0 %v332
    %v411 = vpop.f32.mrf.mxu0
    %v412 = vadd.f32 %v315, %v411
    %v413 = vpop.f32.mrf.mxu0
    %414 = vmatprep.mubr.f32.mxu0 0.0
    %415 = vmatmul.mubr.f32.gmra.mxu0 %v335
    %v416 = vpop.f32.mrf.mxu0
    %v417 = vadd.f32 %v320, %v416
    %v418 = vpop.f32.mrf.mxu0
    %419 = vmatprep.mubr.f32.mxu0 0.0
    %420 = vmatmul.mubr.f32.gmra.mxu0 %v338
    %v421 = vpop.f32.mrf.mxu0
    %v422 = vadd.f32 %v325, %v421
    %v423 = vpop.f32.mrf.mxu0
    %424 = vdwg.mxu0
    %v425 = vmax.f32 %v407, 0.0
    %v426 = vmax.f32 %v412, 0.0
    %v427 = vmax.f32 %v417, 0.0
    %v428 = vmax.f32 %v422, 0.0
    %v429 = vld [vmem:[%s5] sm:$0xff]
    %v430 = vld [vmem:[%s5 + $0x8] sm:$0xff]
    %v431 = vld [vmem:[%s5 + $0x10] sm:$0xff]
    %v432 = vld [vmem:[%s5 + $0x18] sm:$0xff]
    %v433 = vld [vmem:[%s6] sm:$0xff]
    %v434 = vld [vmem:[%s6 + $0x8] sm:$0xff]
    %v435 = vld [vmem:[%s6 + $0x10] sm:$0xff]
    %v436 = vld [vmem:[%s6 + $0x18] sm:$0xff]
    %438 = vset.pattern.permute.xlu0 0
    %439 = vperm.xlu0 %438, %v433
    %v440 = vpop.permute.xlu0 %439
    %443 = vset.pattern.permute.xlu0 0
    %444 = vperm.xlu0 %443, %v434
    %v445 = vpop.permute.xlu0 %444
    %448 = vset.pattern.permute.xlu0 0
    %449 = vperm.xlu0 %448, %v435
    %v450 = vpop.permute.xlu0 %449
    %453 = vset.pattern.permute.xlu0 0
    %454 = vperm.xlu0 %453, %v436
    %v455 = vpop.permute.xlu0 %454
    %v458 = vsel %vm113, %v429, 0
    %v461 = vsel %vm113, %v430, 0
    %v464 = vsel %vm113, %v431, 0
    %v467 = vsel %vm113, %v432, 0
    %469 = vmatprep.subr.mxu0 0.0
    %470 = vmatpush1.msra.mxu0 0.0
    %471 = vmatprep.subr.mxu0 0.0
    %472 = vmatpush1.msra.mxu0 0.0
    %473 = vmatprep.subr.mxu0 0.0
    %474 = vmatpush1.msra.mxu0 0.0
    %475 = vmatprep.subr.mxu0 0.0
    %476 = vmatpush1.msra.mxu0 0.0
    %477 = vmatprep.subr.mxu0 0.0
    %478 = vmatpush1.msra.mxu0 0.0
    %479 = vmatprep.subr.mxu0 0.0
    %480 = vmatpush1.msra.mxu0 0.0
    %481 = vmatprep.subr.mxu0 0.0
    %482 = vmatpush1.msra.mxu0 0.0
    %483 = vmatprep.subr.mxu0 0.0
    %484 = vmatpush1.msra.mxu0 0.0
    %485 = vmatprep.subr.mxu0 0.0
    %486 = vmatpush1.msra.mxu0 0.0
    %487 = vmatprep.subr.mxu0 0.0
    %488 = vmatpush1.msra.mxu0 0.0
    %489 = vmatprep.subr.mxu0 0.0
    %490 = vmatpush1.msra.mxu0 0.0
    %491 = vmatprep.subr.mxu0 0.0
    %492 = vmatpush1.msra.mxu0 0.0
    %493 = vmatprep.subr.mxu0 0.0
    %494 = vmatpush1.msra.mxu0 %v428
    %495 = vmatprep.subr.mxu0 0.0
    %496 = vmatpush1.msra.mxu0 %v427
    %497 = vmatprep.subr.mxu0 0.0
    %498 = vmatpush1.msra.mxu0 %v426
    %499 = vmatprep.subr.mxu0 0.0
    %500 = vmatpush1.msra.mxu0 %v425
    %501 = vmatprep.subr.mxu0 0.0
    %502 = vmatpush2.msra.mxu0 0.0
    %503 = vmatprep.subr.mxu0 0.0
    %504 = vmatpush2.msra.mxu0 0.0
    %505 = vmatprep.subr.mxu0 0.0
    %506 = vmatpush2.msra.mxu0 0.0
    %507 = vmatprep.subr.mxu0 0.0
    %508 = vmatpush2.msra.mxu0 0.0
    %509 = vmatprep.subr.mxu0 0.0
    %510 = vmatpush2.msra.mxu0 0.0
    %511 = vmatprep.subr.mxu0 0.0
    %512 = vmatpush2.msra.mxu0 0.0
    %513 = vmatprep.subr.mxu0 0.0
    %514 = vmatpush2.msra.mxu0 0.0
    %515 = vmatprep.subr.mxu0 0.0
    %516 = vmatpush2.msra.mxu0 0.0
    %517 = vmatprep.subr.mxu0 0.0
    %518 = vmatpush2.msra.mxu0 0.0
    %519 = vmatprep.subr.mxu0 0.0
    %520 = vmatpush2.msra.mxu0 0.0
    %521 = vmatprep.subr.mxu0 0.0
    %522 = vmatpush2.msra.mxu0 0.0
    %523 = vmatprep.subr.mxu0 0.0
    %524 = vmatpush2.msra.mxu0 0.0
    %525 = vmatprep.subr.mxu0 0.0
    %526 = vmatpush2.msra.mxu0 0.0
    %527 = vmatprep.subr.mxu0 0.0
    %528 = vmatpush2.msra.mxu0 0.0
    %529 = vmatprep.subr.mxu0 0.0
    %530 = vmatpush2.msra.mxu0 0.0
    %531 = vmatprep.subr.mxu0 0.0
    %532 = vmatpush2.msra.mxu0 0.0
    %533 = vmatprep.mubr.f32.mxu0 0.0
    %534 = vmatmul.mubr.f32.gmra.mxu0 %v458
    %v535 = vpop.f32.mrf.mxu0
    %v536 = vadd.f32 %v440, %v535
    %v537 = vpop.f32.mrf.mxu0
    %538 = vmatprep.mubr.f32.mxu0 0.0
    %539 = vmatmul.mubr.f32.gmra.mxu0 %v461
    %v540 = vpop.f32.mrf.mxu0
    %v541 = vadd.f32 %v445, %v540
    %v542 = vpop.f32.mrf.mxu0
    %543 = vmatprep.mubr.f32.mxu0 0.0
    %544 = vmatmul.mubr.f32.gmra.mxu0 %v464
    %v545 = vpop.f32.mrf.mxu0
    %v546 = vadd.f32 %v450, %v545
    %v547 = vpop.f32.mrf.mxu0
    %548 = vmatprep.mubr.f32.mxu0 0.0
    %549 = vmatmul.mubr.f32.gmra.mxu0 %v467
    %v550 = vpop.f32.mrf.mxu0
    %v551 = vadd.f32 %v455, %v550
    %v552 = vpop.f32.mrf.mxu0
    %553 = vdwg.mxu0
    %v554 = vmax.f32 %v536, 0.0
    %v555 = vmax.f32 %v541, 0.0
    %v556 = vmax.f32 %v546, 0.0
    %v557 = vmax.f32 %v551, 0.0
    %v558 = vld [vmem:[%s7] sm:$0xff]
    %v559 = vld [vmem:[%s7 + $0x8] sm:$0xff]
    %v560 = vld [vmem:[%s8] sm:$0xff]
    %v561 = vld [vmem:[%s8 + $0x8] sm:$0xff]
    %563 = vset.pattern.permute.xlu0 0
    %564 = vperm.xlu0 %563, %v560
    %v565 = vpop.permute.xlu0 %564
    %568 = vset.pattern.permute.xlu0 0
    %569 = vperm.xlu0 %568, %v561
    %v570 = vpop.permute.xlu0 %569
    %v573 = vsel %vm113, %v558, 0
    %v576 = vsel %vm113, %v559, 0
    %578 = vmatprep.subr.mxu0 0.0
    %579 = vmatpush1.msra.mxu0 0.0
    %580 = vmatprep.subr.mxu0 0.0
    %581 = vmatpush1.msra.mxu0 0.0
    %582 = vmatprep.subr.mxu0 0.0
    %583 = vmatpush1.msra.mxu0 0.0
    %584 = vmatprep.subr.mxu0 0.0
    %585 = vmatpush1.msra.mxu0 0.0
    %586 = vmatprep.subr.mxu0 0.0
    %587 = vmatpush1.msra.mxu0 0.0
    %588 = vmatprep.subr.mxu0 0.0
    %589 = vmatpush1.msra.mxu0 0.0
    %590 = vmatprep.subr.mxu0 0.0
    %591 = vmatpush1.msra.mxu0 0.0
    %592 = vmatprep.subr.mxu0 0.0
    %593 = vmatpush1.msra.mxu0 0.0
    %594 = vmatprep.subr.mxu0 0.0
    %595 = vmatpush1.msra.mxu0 0.0
    %596 = vmatprep.subr.mxu0 0.0
    %597 = vmatpush1.msra.mxu0 0.0
    %598 = vmatprep.subr.mxu0 0.0
    %599 = vmatpush1.msra.mxu0 0.0
    %600 = vmatprep.subr.mxu0 0.0
    %601 = vmatpush1.msra.mxu0 0.0
    %602 = vmatprep.subr.mxu0 0.0
    %603 = vmatpush1.msra.mxu0 %v557
    %604 = vmatprep.subr.mxu0 0.0
    %605 = vmatpush1.msra.mxu0 %v556
    %606 = vmatprep.subr.mxu0 0.0
    %607 = vmatpush1.msra.mxu0 %v555
    %608 = vmatprep.subr.mxu0 0.0
    %609 = vmatpush1.msra.mxu0 %v554
    %610 = vmatprep.subr.mxu0 0.0
    %611 = vmatpush2.msra.mxu0 0.0
    %612 = vmatprep.subr.mxu0 0.0
    %613 = vmatpush2.msra.mxu0 0.0
    %614 = vmatprep.subr.mxu0 0.0
    %615 = vmatpush2.msra.mxu0 0.0
    %616 = vmatprep.subr.mxu0 0.0
    %617 = vmatpush2.msra.mxu0 0.0
    %618 = vmatprep.subr.mxu0 0.0
    %619 = vmatpush2.msra.mxu0 0.0
    %620 = vmatprep.subr.mxu0 0.0
    %621 = vmatpush2.msra.mxu0 0.0
    %622 = vmatprep.subr.mxu0 0.0
    %623 = vmatpush2.msra.mxu0 0.0
    %624 = vmatprep.subr.mxu0 0.0
    %625 = vmatpush2.msra.mxu0 0.0
    %626 = vmatprep.subr.mxu0 0.0
    %627 = vmatpush2.msra.mxu0 0.0
    %628 = vmatprep.subr.mxu0 0.0
    %629 = vmatpush2.msra.mxu0 0.0
    %630 = vmatprep.subr.mxu0 0.0
    %631 = vmatpush2.msra.mxu0 0.0
    %632 = vmatprep.subr.mxu0 0.0
    %633 = vmatpush2.msra.mxu0 0.0
    %634 = vmatprep.subr.mxu0 0.0
    %635 = vmatpush2.msra.mxu0 0.0
    %636 = vmatprep.subr.mxu0 0.0
    %637 = vmatpush2.msra.mxu0 0.0
    %638 = vmatprep.subr.mxu0 0.0
    %639 = vmatpush2.msra.mxu0 0.0
    %640 = vmatprep.subr.mxu0 0.0
    %641 = vmatpush2.msra.mxu0 0.0
    %642 = vmatprep.mubr.f32.mxu0 0.0
    %643 = vmatmul.mubr.f32.gmra.mxu0 %v573
    %v644 = vpop.f32.mrf.mxu0
    %v645 = vadd.f32 %v565, %v644
    %v646 = vpop.f32.mrf.mxu0
    %647 = vmatprep.mubr.f32.mxu0 0.0
    %648 = vmatmul.mubr.f32.gmra.mxu0 %v576
    %v649 = vpop.f32.mrf.mxu0
    %v650 = vadd.f32 %v570, %v649
    %v651 = vpop.f32.mrf.mxu0
    %652 = vdwg.mxu0
    %v653 = vmax.f32 %v645, 0.0
    %v654 = vmax.f32 %v650, 0.0
    %v655 = vld [vmem:[%s9] sm:$0xff]
    %v656 = vld [vmem:[%s9 + $0x8] sm:$0xff]
    %v657 = vld [vmem:[#allocation2] sm:$0x1]
    %659 = vset.pattern.permute.xlu0 0
    %660 = vperm.xlu0 %659, %v655
    %v661 = vpop.permute.xlu0 %660
    %664 = vset.pattern.permute.xlu0 0
    %665 = vperm.xlu0 %664, %v656
    %v666 = vpop.permute.xlu0 %665
    %v668 = vmul.f32 %v653, %v661
    %v669 = vmul.f32 %v654, %v666
    %v670 = vadd.f32 %v668, %v669
    %v671 = vrot.slane %v670, 4
    %v672 = vadd.f32 %v670, %v671
    %v673 = vrot.slane %v672, 2
    %v674 = vadd.f32 %v672, %v673
    %v675 = vrot.slane %v674, 1
    %v676 = vadd.f32 %v674, %v675
    %678 = vset.pattern.permute.xlu0 0
    %679 = vperm.xlu0 %678, %v657
    %v680 = vpop.permute.xlu0 %679
    %v682 = vlaneseq
    %v683 = vshrl.u32 %v682, 7
    %v684 = vsub.s32 0, %v683
    %v685 = vrot.slane %v680, %v684
    %v686 = vadd.f32 %v676, %v685
    %687 = vst [vmem:[#allocation3] sm:$0x1] %v686
    // Predicated region
    $region46: #{tpu_custom_call.1} parent=1 // pred_check
      _
    $region47: #{tpu_custom_call.1} parent=1 // pred_check_branch
      %689 = sbr.rel (0) target = $region49
    $region48: #{tpu_custom_call.1} parent=1 // pred_region
      %s691 = ssub.s32 16, 16
      %692 = vsyncadd [#allocation4], %s691
      %s694 = sshll.u32 [#allocation3], 4
      %s695 = int_to_ptr.vmem [resolvable:$true] %s694
      %697 = dma.vmem_to_hbm [thread:$0]  %s695, 16, %s11, [#allocation4]
    $region49: #{tpu_custom_call.1} parent=1 // pred_fallthru
      _
    // Predicated region
    $region50: #{tpu_custom_call.1} parent=1 // pred_check
      _
    $region51: #{tpu_custom_call.1} parent=1 // pred_check_branch
      %699 = sbr.rel (0) target = $region53
    $region52: #{tpu_custom_call.1} parent=1 // pred_region
      %700 = dma.done [#allocation4], 16
    $region53: #{tpu_custom_call.1} parent=1 // pred_fallthru
      _
    %701 = vsyncpa [#allocation4], 1

</llo_original>
